<compile_context>
chip_gen: v7x
topology: tpu7x:2x2x1
jax: 0.10.0
libtpu: 0.0.40
codegen_flags: <defaults>
</compile_context>

<pallas_src>
import functools

import jax
import jax.numpy as jnp
from jax import lax
from jax.experimental import pallas as pl
from jax.experimental.pallas import tpu as pltpu

B_TILE = 128   # draws per grid step, mapped onto the 128 lanes (lane-dense outputs)


def _round_up(x, m):
    return (x + m - 1) // m * m


def _meta_choice_kernel(u_w_ref, u_e_ref, cv_ref, probs_ref, idx_ref, val_ref,
                        *, n_choices, w_min, w_max):
    """Batched softmax-weighted categorical draw, draws-along-lanes layout.

    u_w_ref   : (SUB, B_TILE) f32  uniforms for the weight logits
    u_e_ref   : (SUB, B_TILE) f32  uniforms for the exponential clocks
    cv_ref    : (SUB, 1)      f32  padded choice values (fused lookup)
    probs_ref : (SUB, B_TILE) f32  softmax probabilities (padded rows = 0)
    idx_ref   : (1,  B_TILE)  i32  sampled choice index  (lane-dense store)
    val_ref   : (1,  B_TILE)  f32  choice_values[idx]    (lane-dense store)
    """
    sub, tb = probs_ref.shape
    row = lax.broadcasted_iota(jnp.int32, (sub, tb), 0)
    valid = row < n_choices

    # Weight logits: row 0 fixed at 1.0, rows 1..n-1 ~ U(w_min, w_max),
    # padded rows -> -1e30 (zero probability).
    w = w_min + u_w_ref[...] * (w_max - w_min)
    w = jnp.where(row == 0, jnp.float32(1.0), w)
    w = jnp.where(valid, w, jnp.float32(-1e30))

    # Softmax over the (sublane) choice axis; exp -> EUP, reduces -> XLU.
    m = jnp.max(w, axis=0, keepdims=True)
    e = jnp.where(valid, jnp.exp(w - m), jnp.float32(0.0))
    z = jnp.sum(e, axis=0, keepdims=True)
    probs_ref[...] = e / z   # exact normalization (interpret-safe; see notes)

    # Categorical draw via exponential clocks: argmax_j e_j / Exp_j,
    # reusing e (only one log per element; padded rows have e = 0 -> clock 0).
    u = jnp.maximum(u_e_ref[...], jnp.float32(1e-12))   # keep -log(u) finite
    clock = e / (-jnp.log(u))
    cmax = jnp.max(clock, axis=0, keepdims=True)
    # Smallest row index attaining the max (float min-reduce: safe lowering).
    sel = jnp.where(clock >= cmax, row.astype(jnp.float32), jnp.float32(sub))
    idx_f = jnp.min(sel, axis=0, keepdims=True)
    idx_i = idx_f.astype(jnp.int32)
    idx_ref[...] = idx_i

    # Fused choice_values[idx]: one-hot select + sublane reduce.
    hit = row == idx_i
    val_ref[...] = jnp.sum(jnp.where(hit, cv_ref[...], jnp.float32(0.0)),
                           axis=0, keepdims=True)


def meta_choice_draw(u_w, u_e, cv, *, n_choices, w_min, w_max):
    """u_w, u_e: (SUB, batch) f32 uniforms; cv: (SUB, 1) f32 padded values.

    Returns (probs (SUB, batch) f32, idx (1, batch) i32, value (1, batch) f32).
    """
    sub, batch = u_w.shape
    assert batch % B_TILE == 0 and sub % 8 == 0

    kernel = functools.partial(
        _meta_choice_kernel, n_choices=n_choices,
        w_min=float(w_min), w_max=float(w_max),
    )
    grid_spec = pltpu.PrefetchScalarGridSpec(
        num_scalar_prefetch=0,
        grid=(batch // B_TILE,),
        in_specs=[
            pl.BlockSpec((sub, B_TILE), lambda i: (0, i)),
            pl.BlockSpec((sub, B_TILE), lambda i: (0, i)),
            pl.BlockSpec((sub, 1), lambda i: (0, 0)),
        ],
        out_specs=(
            pl.BlockSpec((sub, B_TILE), lambda i: (0, i)),
            pl.BlockSpec((1, B_TILE), lambda i: (0, i)),
            pl.BlockSpec((1, B_TILE), lambda i: (0, i)),
        ),
    )
    return pl.pallas_call(
        kernel,
        grid_spec=grid_spec,
        out_shape=(
            jax.ShapeDtypeStruct((sub, batch), jnp.float32),
            jax.ShapeDtypeStruct((1, batch), jnp.int32),
            jax.ShapeDtypeStruct((1, batch), jnp.float32),
        ),
        compiler_params=pltpu.CompilerParams(
            dimension_semantics=("parallel",),   # splits across 2 TCs on v7x
        ),
    )(u_w, u_e, cv)


class HpSamplerPallas:
    """JAX/Pallas re-implementation of HpSampler's forward pass.

    Supported distributions:
      - 'uniform'           : plain uniform(min, max) scalar (glue, no kernel)
      - 'meta_choice'       : softmax-weighted categorical draw (Pallas kernel)
      - 'meta_choice_mixed' : same kernel, weight range (-5, 6)
    # TODO(synk): meta_beta / meta_gamma / meta_trunc_norm* are host-side
    # scipy/numpy scalar samplers with no tensor hot path -> not kernelized.
    """

    def __init__(self, distribution, **kwargs):
        self.distribution = distribution
        for k, v in kwargs.items():
            setattr(self, k, v)
        if distribution in ("meta_choice", "meta_choice_mixed"):
            # mirrors ensure_hyperparameter(f'choice_{i}_weight', uniform, lo, hi)
            self._w_min, self._w_max = (
                (-3.0, 5.0) if distribution == "meta_choice" else (-5.0, 6.0)
            )
            self.n_choices = len(self.choice_values)
            assert self.n_choices >= 1
            self._sub = max(8, _round_up(self.n_choices, 8))
            # meta_choice_mixed choice_values may be callables; fused numeric
            # value output is then a placeholder and idx is authoritative.
            vals = [float(v) if isinstance(v, (int, float)) else 0.0
                    for v in self.choice_values]
            vals = vals + [0.0] * (self._sub - self.n_choices)
            self._cv = jnp.asarray(vals, dtype=jnp.float32).reshape(self._sub, 1)
        elif distribution == "uniform":
            pass
        else:
            raise ValueError(f"Unsupported distribution: {distribution}")

    def forward(self, key, batch=B_TILE):
        if self.distribution == "uniform":
            return jax.random.uniform(key, (), minval=self.min, maxval=self.max)

        # --- meta_choice / meta_choice_mixed: batch independent forward() draws ---
        padded = _round_up(batch, B_TILE)
        kw, ke = jax.random.split(key)
        u_w = jax.random.uniform(kw, (self._sub, padded), dtype=jnp.float32)
        u_e = jax.random.uniform(ke, (self._sub, padded), dtype=jnp.float32)
        probs, idx, vals = meta_choice_draw(
            u_w, u_e, self._cv, n_choices=self.n_choices,
            w_min=self._w_min, w_max=self._w_max,
        )
        return probs[:, :batch], idx[0, :batch], vals[0, :batch]


if __name__ == "__main__":
    key = jax.random.PRNGKey(0)

    choice_values = [0.25, 0.5, 1.0, 2.0]
    sampler = HpSamplerPallas("meta_choice", choice_values=choice_values)

    B = 256  # two 128-lane grid steps -> both v7x TensorCores get work
    probs, idx, vals = sampler.forward(key, batch=B)
    probs = jax.block_until_ready(probs)
    idx = jax.block_until_ready(idx)
    vals = jax.block_until_ready(vals)

    n = len(choice_values)
    assert probs.shape == (8, B) and idx.shape == (B,) and vals.shape == (B,)

    # sanity checks against the module's semantics
    col_sums = jnp.sum(probs[:n, :], axis=0)
    assert float(jnp.max(jnp.abs(col_sums - 1.0))) < 1e-4, "softmax not normalized"
    assert float(jnp.max(jnp.abs(probs[n:, :]))) < 1e-6, "padded rows leaked mass"
    idx_host = [int(i) for i in idx]
    assert all(0 <= i < n for i in idx_host), "sampled index out of range"
    cv = jnp.asarray(choice_values, jnp.float32)
    assert float(jnp.max(jnp.abs(vals - cv[idx]))) < 1e-6, "fused value lookup wrong"
    assert len(set(idx_host)) > 1, "256 independent draws collapsed to one value"
    assert float(jnp.max(jnp.abs(probs[:, 0] - probs[:, 1]))) > 0.0, \
        "batch columns should be independent draws"

    # also exercise the mixed-weight branch (same kernel, different range)
    mixed = HpSamplerPallas("meta_choice_mixed", choice_values=choice_values)
    pm, im, vm = mixed.forward(jax.random.PRNGKey(2), batch=B)
    jax.block_until_ready(im)
    assert all(0 <= int(i) < n for i in im)

    # and the trivial 'uniform' branch (glue path, no kernel)
    u_sampler = HpSamplerPallas("uniform", min=0.0, max=1.0)
    _ = jax.block_until_ready(u_sampler.forward(jax.random.PRNGKey(1)))

    print("KERNEL_OK")
</pallas_src>

<mosaic_0001>
module attributes {stable_mosaic.version = 11 : i64} {
  func.func @_meta_choice_kernel(%arg0: i32, %arg1: memref<8x128xf32, #tpu.memory_space<vmem>>, %arg2: memref<8x128xf32, #tpu.memory_space<vmem>>, %arg3: memref<8x1xf32, #tpu.memory_space<vmem>>, %arg4: memref<8x128xf32, #tpu.memory_space<vmem>>, %arg5: memref<1x128xi32, #tpu.memory_space<vmem>>, %arg6: memref<1x128xf32, #tpu.memory_space<vmem>>) attributes {dimension_semantics = [#tpu.dimension_semantics<parallel>], iteration_bounds = array<i64: 2>, scalar_prefetch = 0 : i64, scratch_operands = 0 : i64, tpu.core_type = #tpu.core_type<tc>, window_params = [{transform_indices = @transform_0, window_bounds = array<i64: 8, 128>}, {transform_indices = @transform_1, window_bounds = array<i64: 8, 128>}, {pipeline_mode = #tpu.pipeline_mode<synchronous>, transform_indices = @transform_2, window_bounds = array<i64: 8, 1>}, {transform_indices = @transform_3, window_bounds = array<i64: 8, 128>}, {transform_indices = @transform_4, window_bounds = array<i64: 1, 128>}, {transform_indices = @transform_5, window_bounds = array<i64: 1, 128>}]} {
    %0 = tpu.iota {dimensions = array<i32: 0>} : vector<8x128xi32>
    %c4_i32 = arith.constant 4 : i32
    %1 = vector.broadcast %c4_i32 : i32 to vector<8x128xi32>
    %2 = arith.cmpi slt, %0, %1 : vector<8x128xi32>
    %c0 = arith.constant 0 : index
    %c0_0 = arith.constant 0 : index
    %3 = vector.load %arg1[%c0, %c0_0] : memref<8x128xf32, #tpu.memory_space<vmem>>, vector<8x128xf32>
    %cst = arith.constant 8.000000e+00 : f32
    %4 = vector.broadcast %cst : f32 to vector<8x128xf32>
    %5 = arith.mulf %3, %4 : vector<8x128xf32>
    %cst_1 = arith.constant -3.000000e+00 : f32
    %6 = vector.broadcast %cst_1 : f32 to vector<8x128xf32>
    %7 = arith.addf %6, %5 : vector<8x128xf32>
    %c0_i32 = arith.constant 0 : i32
    %8 = vector.broadcast %c0_i32 : i32 to vector<8x128xi32>
    %9 = arith.cmpi eq, %0, %8 : vector<8x128xi32>
    %cst_2 = arith.constant 1.000000e+00 : f32
    %10 = vector.broadcast %cst_2 : f32 to vector<8x128xf32>
    %11 = arith.select %9, %10, %7 : vector<8x128xi1>, vector<8x128xf32>
    %cst_3 = arith.constant -1.000000e+30 : f32
    %12 = vector.broadcast %cst_3 : f32 to vector<8x128xf32>
    %13 = arith.select %2, %11, %12 : vector<8x128xi1>, vector<8x128xf32>
    %cst_4 = arith.constant dense<0xFF800000> : vector<128xf32>
    %14 = vector.multi_reduction <maximumf>, %13, %cst_4 [0] : vector<8x128xf32> to vector<128xf32>
    %15 = vector.shape_cast %14 : vector<128xf32> to vector<1x128xf32>
    %16 = vector.broadcast %15 : vector<1x128xf32> to vector<8x128xf32>
    %17 = arith.subf %13, %16 : vector<8x128xf32>
    %18 = math.exp %17 : vector<8x128xf32>
    %cst_5 = arith.constant 0.000000e+00 : f32
    %19 = vector.broadcast %cst_5 : f32 to vector<8x128xf32>
    %20 = arith.select %2, %18, %19 : vector<8x128xi1>, vector<8x128xf32>
    %cst_6 = arith.constant dense<0.000000e+00> : vector<128xf32>
    %21 = vector.multi_reduction <add>, %20, %cst_6 [0] : vector<8x128xf32> to vector<128xf32>
    %22 = vector.shape_cast %21 : vector<128xf32> to vector<1x128xf32>
    %23 = vector.broadcast %22 : vector<1x128xf32> to vector<8x128xf32>
    %24 = arith.divf %20, %23 : vector<8x128xf32>
    %c0_7 = arith.constant 0 : index
    %c0_8 = arith.constant 0 : index
    %25 = vector.load %arg4[%c0_7, %c0_8] : memref<8x128xf32, #tpu.memory_space<vmem>>, vector<8x128xf32>
    tpu.vector_store %arg4[%c0_7, %c0_8], %24 {strides = array<i32>} : memref<8x128xf32, #tpu.memory_space<vmem>>, vector<8x128xf32>,
    %c0_9 = arith.constant 0 : index
    %c0_10 = arith.constant 0 : index
    %26 = vector.load %arg2[%c0_9, %c0_10] : memref<8x128xf32, #tpu.memory_space<vmem>>, vector<8x128xf32>
    %cst_11 = arith.constant 9.99999996E-13 : f32
    %27 = vector.broadcast %cst_11 : f32 to vector<8x128xf32>
    %28 = arith.maximumf %26, %27 : vector<8x128xf32>
    %29 = math.log %28 : vector<8x128xf32>
    %cst_12 = arith.constant 0.000000e+00 : f32
    %30 = vector.broadcast %cst_12 : f32 to vector<8x128xf32>
    %31 = arith.subf %30, %29 : vector<8x128xf32>
    %32 = arith.divf %20, %31 : vector<8x128xf32>
    %cst_13 = arith.constant dense<0xFF800000> : vector<128xf32>
    %33 = vector.multi_reduction <maximumf>, %32, %cst_13 [0] : vector<8x128xf32> to vector<128xf32>
    %34 = vector.shape_cast %33 : vector<128xf32> to vector<1x128xf32>
    %35 = vector.broadcast %34 : vector<1x128xf32> to vector<8x128xf32>
    %36 = arith.cmpf oge, %32, %35 : vector<8x128xf32>
    %37 = arith.sitofp %0 : vector<8x128xi32> to vector<8x128xf32>
    %cst_14 = arith.constant 8.000000e+00 : f32
    %38 = vector.broadcast %cst_14 : f32 to vector<8x128xf32>
    %39 = arith.select %36, %37, %38 : vector<8x128xi1>, vector<8x128xf32>
    %cst_15 = arith.constant dense<0x7F800000> : vector<128xf32>
    %40 = vector.multi_reduction <minimumf>, %39, %cst_15 [0] : vector<8x128xf32> to vector<128xf32>
    %41 = vector.shape_cast %40 : vector<128xf32> to vector<1x128xf32>
    %42 = arith.fptosi %41 : vector<1x128xf32> to vector<1x128xi32>
    %c0_16 = arith.constant 0 : index
    %c0_17 = arith.constant 0 : index
    %43 = vector.load %arg5[%c0_16, %c0_17] : memref<1x128xi32, #tpu.memory_space<vmem>>, vector<1x128xi32>
    tpu.vector_store %arg5[%c0_16, %c0_17], %42 {strides = array<i32>} : memref<1x128xi32, #tpu.memory_space<vmem>>, vector<1x128xi32>,
    %44 = vector.broadcast %42 : vector<1x128xi32> to vector<8x128xi32>
    %45 = arith.cmpi eq, %0, %44 : vector<8x128xi32>
    %c0_18 = arith.constant 0 : index
    %c0_19 = arith.constant 0 : index
    %46 = vector.load %arg3[%c0_18, %c0_19] : memref<8x1xf32, #tpu.memory_space<vmem>>, vector<8x1xf32>
    %cst_20 = arith.constant 0.000000e+00 : f32
    %47 = vector.shape_cast %46 : vector<8x1xf32> to vector<8x1xf32>
    %48 = vector.broadcast %47 : vector<8x1xf32> to vector<8x128xf32>
    %49 = vector.broadcast %cst_20 : f32 to vector<8x128xf32>
    %50 = arith.select %45, %48, %49 : vector<8x128xi1>, vector<8x128xf32>
    %cst_21 = arith.constant dense<0.000000e+00> : vector<128xf32>
    %51 = vector.multi_reduction <add>, %50, %cst_21 [0] : vector<8x128xf32> to vector<128xf32>
    %52 = vector.shape_cast %51 : vector<128xf32> to vector<1x128xf32>
    %c0_22 = arith.constant 0 : index
    %c0_23 = arith.constant 0 : index
    %53 = vector.load %arg6[%c0_22, %c0_23] : memref<1x128xf32, #tpu.memory_space<vmem>>, vector<1x128xf32>
    tpu.vector_store %arg6[%c0_22, %c0_23], %52 {strides = array<i32>} : memref<1x128xf32, #tpu.memory_space<vmem>>, vector<1x128xf32>,
    return
  }
  func.func @transform_0(%arg0: i32) -> (i32, i32) {
    %c0_i32 = arith.constant 0 : i32
    %c0_i32_0 = arith.constant 0 : i32
    return %c0_i32, %arg0 : i32, i32
  }
  func.func @transform_1(%arg0: i32) -> (i32, i32) {
    %c0_i32 = arith.constant 0 : i32
    %c0_i32_0 = arith.constant 0 : i32
    return %c0_i32, %arg0 : i32, i32
  }
  func.func @transform_2(%arg0: i32) -> (i32, i32) {
    %c0_i32 = arith.constant 0 : i32
    %c0_i32_0 = arith.constant 0 : i32
    %c0_i32_1 = arith.constant 0 : i32
    return %c0_i32, %c0_i32_0 : i32, i32
  }
  func.func @transform_3(%arg0: i32) -> (i32, i32) {
    %c0_i32 = arith.constant 0 : i32
    %c0_i32_0 = arith.constant 0 : i32
    return %c0_i32, %arg0 : i32, i32
  }
  func.func @transform_4(%arg0: i32) -> (i32, i32) {
    %c0_i32 = arith.constant 0 : i32
    %c0_i32_0 = arith.constant 0 : i32
    return %c0_i32, %arg0 : i32, i32
  }
  func.func @transform_5(%arg0: i32) -> (i32, i32) {
    %c0_i32 = arith.constant 0 : i32
    %c0_i32_0 = arith.constant 0 : i32
    return %c0_i32, %arg0 : i32, i32
  }
}

</mosaic_0001>

<llo_original>
// kernel: tpu_custom_call.1
$region0: #{tpu_custom_call.1}
  #allocation0 [shape = 'u32[]', space=smem, size = 0x4, offset = 0x4, fixed_abs, tag = 'smem constant byte address 0x4 - core index']
  #allocation1 [shape = 'u32[144,128]{1,0:T(1,128)}', space=vmem, size = 0x12000, scoped, tag = 'internal scratch']
  %s0 = inlined_call_operand.hbm [shape: f32[8,256], index: 0, kind: input, shape index: {}]
  %s1 = inlined_call_operand.hbm [shape: f32[8,256], index: 1, kind: input, shape index: {}]
  %s2 = inlined_call_operand.vmem [shape: f32[8,1], index: 2, kind: input, shape index: {}]
  %s3 = inlined_call_operand.hbm [shape: f32[8,256], index: 3, kind: output, shape index: {0}]
  %s4 = inlined_call_operand.hbm [shape: s32[1,256], index: 4, kind: output, shape index: {1}]
  %s5 = inlined_call_operand.hbm [shape: f32[1,256], index: 5, kind: output, shape index: {2}]
  %6 = xla_tuple %s3, %s4, %s5
  %s7 = sld [smem:[#allocation0]]
  $region69: #{tpu_custom_call.1} parent=0
    _
  %s9 = ssub.s32 1, %s7
  %s10 = scalar_select 0, %s9, %s7
  $region1: #{tpu_custom_call.1} parent=0
    #allocation2 [shape = 'u8[8192]{0}', space=vmem, size = 0x2000, scoped, tag = 'input window, operand 0']
    #allocation3 [shape = 's32[2]{0}', space=sflag, size = 0x8, scoped, tag = 'scoped memory for tpu_custom_call.1']
    #allocation4 [shape = 's32[2]{0}', space=sflag, size = 0x8, scoped, tag = 'scoped memory for tpu_custom_call.1']
    #allocation5 [shape = 'u8[8192]{0}', space=vmem, size = 0x2000, scoped, tag = 'input window, operand 1']
    #allocation6 [shape = 's32[2]{0}', space=sflag, size = 0x8, scoped, tag = 'scoped memory for tpu_custom_call.1']
    #allocation7 [shape = 'u8[8192]{0}', space=vmem, size = 0x2000, scoped, tag = 'output window, operand 0']
    #allocation8 [shape = 'u8[1024]{0}', space=vmem, size = 0x400, scoped, tag = 'output window, operand 1']
    #allocation9 [shape = 's32[2]{0}', space=sflag, size = 0x8, scoped, tag = 'scoped memory for tpu_custom_call.1']
    #allocation10 [shape = 'u8[1024]{0}', space=vmem, size = 0x400, scoped, tag = 'output window, operand 2']
    %11 = vsyncpa [#allocation3], 0
    %s12 = scalar_lea.sflag [#allocation3], 1
    %13 = vsyncpa %s12, 0
    %14 = vsyncpa [#allocation6], 0
    %s15 = scalar_lea.sflag [#allocation6], 1
    %16 = vsyncpa %s15, 0
    %17 = vsyncpa [#allocation4], 0
    %s18 = scalar_lea.sflag [#allocation4], 1
    %19 = vsyncpa %s18, 0
    %20 = vsyncpa [#allocation9], 0
    %s21 = scalar_lea.sflag [#allocation9], 1
    %22 = vsyncpa %s21, 0
    loop: start=0, step=1, limit=4
    $region2: #{tpu_custom_call.1} parent=1 // loop_pre_header
      _
    $region3: #{tpu_custom_call.1} parent=1 // loop_header
      %s24 = sphi 0, %s28
      %p25 = scmp.ge.s32.totalorder %s24, 4
      %s34 = sphi 0, %s36
      %s37 = sphi 0, %s34
      %s38 = sphi 0, %s37
      %s54 = sphi 0, %s38
      %s60 = sphi 0, %s62
      %s63 = sphi 0, %s60
      %s64 = sphi 0, %s63
      %s80 = sphi 0, %s64
      %s84 = sphi 0, %s84
      %s86 = sphi 0, %s84
      %s87 = sphi 0, %s86
      %s101 = sphi 0, %s87
      %s107 = sphi 0, %s109
      %s110 = sphi 0, %s107
      %s111 = sphi 0, %s110
      %s127 = sphi 0, %s111
      %s133 = sphi 0, %s135
      %s136 = sphi 0, %s133
      %s137 = sphi 0, %s136
      %s153 = sphi 0, %s137
      %s159 = sphi 0, %s161
      %s162 = sphi 0, %s159
      %s163 = sphi 0, %s162
      %s179 = sphi 0, %s163
    $region4: #{tpu_custom_call.1} parent=1 // loop_header_branch
      %27 = sbr.rel (%p25) target = $region8
    $region5: #{tpu_custom_call.1} parent=1 // loop_body
      %s29 = ssub.s32 %s24, 1
      %s30 = ssub.s32 %s24, 2
      %s31 = sadd.s32 %s24, 1
      %s32 = ssub.s32 %s24, %s31
      %p33 = scmp.eq.s32.totalorder %s32, 0
      %s35 = sadd.s32 %s34, 1
      %s36 = scalar_select %p33, %s34, %s35
      %p39 = pneg %p33
      %p40 = scmp.eq.s32.totalorder %s24, 1
      %p41 = por %p39, %p40
      %p42 = scmp.ne.s32.totalorder %s34, %s37
      %p43 = scmp.eq.s32.totalorder %s24, 0
      %p44 = por %p42, %p43
      %p45 = scmp.ne.s32.totalorder %s34, %s37
      %p46 = scmp.eq.s32.totalorder %s29, 1
      %p47 = por %p45, %p46
      %p48 = scmp.ne.s32.totalorder %s37, %s38
      %p49 = scmp.eq.s32.totalorder %s29, 0
      %p50 = por %p48, %p49
      %p51 = scmp.ne.s32.totalorder %s37, %s38
      %p52 = scmp.eq.s32.totalorder %s30, 1
      %p53 = por %p51, %p52
      %p55 = scmp.ne.s32.totalorder %s38, %s54
      %p56 = scmp.eq.s32.totalorder %s30, 0
      %p57 = por %p55, %p56
      %s58 = ssub.s32 %s24, %s31
      %p59 = scmp.eq.s32.totalorder %s58, 0
      %s61 = sadd.s32 %s60, 1
      %s62 = scalar_select %p59, %s60, %s61
      %p65 = pneg %p59
      %p66 = scmp.eq.s32.totalorder %s24, 1
      %p67 = por %p65, %p66
      %p68 = scmp.ne.s32.totalorder %s60, %s63
      %p69 = scmp.eq.s32.totalorder %s24, 0
      %p70 = por %p68, %p69
      %p71 = scmp.ne.s32.totalorder %s60, %s63
      %p72 = scmp.eq.s32.totalorder %s29, 1
      %p73 = por %p71, %p72
      %p74 = scmp.ne.s32.totalorder %s63, %s64
      %p75 = scmp.eq.s32.totalorder %s29, 0
      %p76 = por %p74, %p75
      %p77 = scmp.ne.s32.totalorder %s63, %s64
      %p78 = scmp.eq.s32.totalorder %s30, 1
      %p79 = por %p77, %p78
      %p81 = scmp.ne.s32.totalorder %s64, %s80
      %p82 = scmp.eq.s32.totalorder %s30, 0
      %p83 = por %p81, %p82
      %s85 = sadd.s32 %s84, 1
      %p88 = scmp.eq.s32.totalorder %s24, 1
      %p89 = scmp.ne.s32.totalorder %s84, %s86
      %p90 = scmp.eq.s32.totalorder %s24, 0
      %p91 = por %p89, %p90
      %p92 = scmp.ne.s32.totalorder %s84, %s86
      %p93 = scmp.eq.s32.totalorder %s29, 1
      %p94 = por %p92, %p93
      %p95 = scmp.ne.s32.totalorder %s86, %s87
      %p96 = scmp.eq.s32.totalorder %s29, 0
      %p97 = por %p95, %p96
      %p98 = scmp.ne.s32.totalorder %s86, %s87
      %p99 = scmp.eq.s32.totalorder %s30, 1
      %p100 = por %p98, %p99
      %p102 = scmp.ne.s32.totalorder %s87, %s101
      %p103 = scmp.eq.s32.totalorder %s30, 0
      %p104 = por %p102, %p103
      %s105 = ssub.s32 %s24, %s31
      %p106 = scmp.eq.s32.totalorder %s105, 0
      %s108 = sadd.s32 %s107, 1
      %s109 = scalar_select %p106, %s107, %s108
      %p112 = pneg %p106
      %p113 = scmp.eq.s32.totalorder %s24, 1
      %p114 = por %p112, %p113
      %p115 = scmp.ne.s32.totalorder %s107, %s110
      %p116 = scmp.eq.s32.totalorder %s24, 0
      %p117 = por %p115, %p116
      %p118 = scmp.ne.s32.totalorder %s107, %s110
      %p119 = scmp.eq.s32.totalorder %s29, 1
      %p120 = por %p118, %p119
      %p121 = scmp.ne.s32.totalorder %s110, %s111
      %p122 = scmp.eq.s32.totalorder %s29, 0
      %p123 = por %p121, %p122
      %p124 = scmp.ne.s32.totalorder %s110, %s111
      %p125 = scmp.eq.s32.totalorder %s30, 1
      %p126 = por %p124, %p125
      %p128 = scmp.ne.s32.totalorder %s111, %s127
      %p129 = scmp.eq.s32.totalorder %s30, 0
      %p130 = por %p128, %p129
      %s131 = ssub.s32 %s24, %s31
      %p132 = scmp.eq.s32.totalorder %s131, 0
      %s134 = sadd.s32 %s133, 1
      %s135 = scalar_select %p132, %s133, %s134
      %p138 = pneg %p132
      %p139 = scmp.eq.s32.totalorder %s24, 1
      %p140 = por %p138, %p139
      %p141 = scmp.ne.s32.totalorder %s133, %s136
      %p142 = scmp.eq.s32.totalorder %s24, 0
      %p143 = por %p141, %p142
      %p144 = scmp.ne.s32.totalorder %s133, %s136
      %p145 = scmp.eq.s32.totalorder %s29, 1
      %p146 = por %p144, %p145
      %p147 = scmp.ne.s32.totalorder %s136, %s137
      %p148 = scmp.eq.s32.totalorder %s29, 0
      %p149 = por %p147, %p148
      %p150 = scmp.ne.s32.totalorder %s136, %s137
      %p151 = scmp.eq.s32.totalorder %s30, 1
      %p152 = por %p150, %p151
      %p154 = scmp.ne.s32.totalorder %s137, %s153
      %p155 = scmp.eq.s32.totalorder %s30, 0
      %p156 = por %p154, %p155
      %s157 = ssub.s32 %s24, %s31
      %p158 = scmp.eq.s32.totalorder %s157, 0
      %s160 = sadd.s32 %s159, 1
      %s161 = scalar_select %p158, %s159, %s160
      %p164 = pneg %p158
      %p165 = scmp.eq.s32.totalorder %s24, 1
      %p166 = por %p164, %p165
      %p167 = scmp.ne.s32.totalorder %s159, %s162
      %p168 = scmp.eq.s32.totalorder %s24, 0
      %p169 = por %p167, %p168
      %p170 = scmp.ne.s32.totalorder %s159, %s162
      %p171 = scmp.eq.s32.totalorder %s29, 1
      %p172 = por %p170, %p171
      %p173 = scmp.ne.s32.totalorder %s162, %s163
      %p174 = scmp.eq.s32.totalorder %s29, 0
      %p175 = por %p173, %p174
      %p176 = scmp.ne.s32.totalorder %s162, %s163
      %p177 = scmp.eq.s32.totalorder %s30, 1
      %p178 = por %p176, %p177
      %p180 = scmp.ne.s32.totalorder %s163, %s179
      %p181 = scmp.eq.s32.totalorder %s30, 0
      %p182 = por %p180, %p181
      %p183 = scmp.le.s32.totalorder 1, %s24
      %p184 = scmp.lt.s32.totalorder %s24, 3
      %p185 = pnand %p183, %p184
      %p186 = pneg %p185
      // Predicated region
      $region9: #{tpu_custom_call.1} parent=5 // pred_check
        _
      $region10: #{tpu_custom_call.1} parent=5 // pred_check_branch
        %188 = sbr.rel (%p185) target = $region12
      $region11: #{tpu_custom_call.1} parent=5 // pred_region
        %s189 = ssub.s32 %s24, 1
        // Predicated region
        $region13: #{tpu_custom_call.1} parent=11 // pred_check
          %p190 = pneg %p97
        $region14: #{tpu_custom_call.1} parent=11 // pred_check_branch
          %192 = sbr.rel (%p190) target = $region16
        $region15: #{tpu_custom_call.1} parent=11 // pred_region
          _
        $region16: #{tpu_custom_call.1} parent=11 // pred_fallthru
          _
      $region12: #{tpu_custom_call.1} parent=5 // pred_fallthru
        _
      %p193 = scmp.lt.s32.totalorder %s24, 2
      // Predicated region
      $region17: #{tpu_custom_call.1} parent=5 // pred_check
        %p194 = pneg %p193
      $region18: #{tpu_custom_call.1} parent=5 // pred_check_branch
        %196 = sbr.rel (%p194) target = $region20
      $region19: #{tpu_custom_call.1} parent=5 // pred_region
        // Predicated region
        $region21: #{tpu_custom_call.1} parent=19 // pred_check
          %p197 = pneg %p44
        $region22: #{tpu_custom_call.1} parent=19 // pred_check_branch
          %199 = sbr.rel (%p197) target = $region24
        $region23: #{tpu_custom_call.1} parent=19 // pred_region
          %s200 = sand.u32 %s34, 1
          %s201 = scalar_lea.sflag [#allocation3], %s200
          %s202 = sand.u32 %s34, 1
          %s203 = smul.addr %s202, 8
          %s204 = scalar_lea.vmem [#allocation2], %s203
          %s206 = ssub.s32 128, 128
          %207 = vsyncadd %s201, %s206
          %s208 = smul.addr %s24, 128
          %s209 = scalar_lea.hbm %s0, %s208
          %s211 = sshll.u32 %s204, 4
          %s212 = int_to_ptr.vmem [resolvable:$true] %s211
          %214 = dma.hbm_to_vmem [thread:$0]  %s209, 128, %s212, %s201
        $region24: #{tpu_custom_call.1} parent=19 // pred_fallthru
          _
        // Predicated region
        $region25: #{tpu_custom_call.1} parent=19 // pred_check
          %p215 = pneg %p70
        $region26: #{tpu_custom_call.1} parent=19 // pred_check_branch
          %217 = sbr.rel (%p215) target = $region28
        $region27: #{tpu_custom_call.1} parent=19 // pred_region
          %s218 = sand.u32 %s60, 1
          %s219 = scalar_lea.sflag [#allocation6], %s218
          %s220 = sand.u32 %s60, 1
          %s221 = smul.addr %s220, 8
          %s222 = scalar_lea.vmem [#allocation5], %s221
          %s224 = ssub.s32 128, 128
          %225 = vsyncadd %s219, %s224
          %s226 = smul.addr %s24, 128
          %s227 = scalar_lea.hbm %s1, %s226
          %s229 = sshll.u32 %s222, 4
          %s230 = int_to_ptr.vmem [resolvable:$true] %s229
          %232 = dma.hbm_to_vmem [thread:$0]  %s227, 128, %s230, %s219
        $region28: #{tpu_custom_call.1} parent=19 // pred_fallthru
          _
      $region20: #{tpu_custom_call.1} parent=5 // pred_fallthru
        _
      %p233 = scmp.le.s32.totalorder 1, %s24
      %p234 = scmp.lt.s32.totalorder %s24, 3
      %p235 = pnand %p233, %p234
      %p236 = pneg %p235
      // Predicated region
      $region29: #{tpu_custom_call.1} parent=5 // pred_check
        _
      $region30: #{tpu_custom_call.1} parent=5 // pred_check_branch
        %238 = sbr.rel (%p235) target = $region32
      $region31: #{tpu_custom_call.1} parent=5 // pred_region
        %s239 = ssub.s32 %s24, 1
        %s240 = sand.u32 %s37, 1
        %s241 = scalar_lea.sflag [#allocation3], %s240
        %s242 = sand.u32 %s37, 1
        %s243 = smul.addr %s242, 8
        %s244 = scalar_lea.vmem [#allocation2], %s243
        // Predicated region
        $region33: #{tpu_custom_call.1} parent=31 // pred_check
          %p245 = pneg %p50
        $region34: #{tpu_custom_call.1} parent=31 // pred_check_branch
          %247 = sbr.rel (%p245) target = $region36
        $region35: #{tpu_custom_call.1} parent=31 // pred_region
          %248 = dma.done %s241, 128
        $region36: #{tpu_custom_call.1} parent=31 // pred_fallthru
          _
        %s249 = sand.u32 %s63, 1
        %s250 = scalar_lea.sflag [#allocation6], %s249
        %s251 = sand.u32 %s63, 1
        %s252 = smul.addr %s251, 8
        %s253 = scalar_lea.vmem [#allocation5], %s252
        // Predicated region
        $region37: #{tpu_custom_call.1} parent=31 // pred_check
          %p254 = pneg %p76
        $region38: #{tpu_custom_call.1} parent=31 // pred_check_branch
          %256 = sbr.rel (%p254) target = $region40
        $region39: #{tpu_custom_call.1} parent=31 // pred_region
          %257 = dma.done %s250, 128
        $region40: #{tpu_custom_call.1} parent=31 // pred_fallthru
          _
        %s258 = sand.u32 %s37, 1
        %s259 = scalar_lea.sflag [#allocation3], %s258
        %s260 = sand.u32 %s37, 1
        %s261 = smul.addr %s260, 8
        %s262 = scalar_lea.vmem [#allocation2], %s261
        %p263 = pneg %p50
        %p264 = pneg %p47
        %s265 = sand.u32 %s63, 1
        %s266 = scalar_lea.sflag [#allocation6], %s265
        %s267 = sand.u32 %s63, 1
        %s268 = smul.addr %s267, 8
        %s269 = scalar_lea.vmem [#allocation5], %s268
        %p270 = pneg %p76
        %p271 = pneg %p73
        %p272 = pneg %p97
        %p273 = pneg %p94
        %p274 = pneg %p123
        %p275 = pneg %p120
        %s276 = sand.u32 %s110, 1
        %s277 = scalar_lea.sflag [#allocation4], %s276
        %s278 = sand.u32 %s110, 1
        %s279 = smul.addr %s278, 8
        %s280 = scalar_lea.vmem [#allocation7], %s279
        %p281 = pneg %p149
        %p282 = pneg %p146
        %s283 = sand.u32 %s29, 1
        %s284 = scalar_lea.sflag [#allocation9], %s283
        %s285 = sand.u32 %s136, 1
        %s286 = scalar_lea.vmem [#allocation8], %s285
        %p287 = pneg %p175
        %p288 = pneg %p172
        %s289 = sand.u32 %s29, 1
        %s290 = scalar_lea.sflag [#allocation9], %s289
        %s291 = sand.u32 %s162, 1
        %s292 = scalar_lea.vmem [#allocation10], %s291
        %v293 = vlaneseq
        %v294 = vshrl.u32 %v293, 7
        %vm295 = vcmp.lt.s32.totalorder %v294, 4
        %v296 = vld [vmem:[%s244] sm:$0xff]
        %v297 = vmul.f32 %v296, 8.0
        %v298 = vadd.f32 %v297, -3.0
        %vm299 = vcmp.eq.s32.totalorder %v294, 0
        %v300 = vsel %vm299, 1.0, %v298
        %v301 = vsel %vm295, %v300, -1e+30
        %v302 = vrot.slane %v301, 4
        %v303 = vmax.f32 %v301, %v302
        %v304 = vrot.slane %v303, 2
        %v305 = vmax.f32 %v303, %v304
        %v306 = vrot.slane %v305, 1
        %v307 = vmax.f32 %v305, %v306
        %v308 = vsub.f32 %v301, %v307
        %v309 = vmul.f32 %v308, 1.442695
        %v310 = vpow.pop %v309
        %v311 = vsel %vm295, %v310, 0.0
        %v312 = vrot.slane %v311, 4
        %v313 = vadd.f32 %v311, %v312
        %v314 = vrot.slane %v313, 2
        %v315 = vadd.f32 %v313, %v314
        %v316 = vrot.slane %v315, 1
        %v317 = vadd.f32 %v315, %v316
        %v318 = vrcp.pop %v317
        %v319 = vmul.f32 %v311, %v318
        %320 = vst [vmem:[%s280] sm:$0xff] %v319
        %v321 = vld [vmem:[%s253] sm:$0xff]
        %v322 = vmax.f32 %v321, 1e-12
        %v323 = vlog2.pop %v322
        %v324 = vmul.f32 %v323, 0.6931472
        %v325 = vsub.f32 0.0, %v324
        %v326 = vrcp.pop %v325
        %v327 = vmul.f32 %v311, %v326
        %v328 = vrot.slane %v327, 4
        %v329 = vmax.f32 %v327, %v328
        %v330 = vrot.slane %v329, 2
        %v331 = vmax.f32 %v329, %v330
        %v332 = vrot.slane %v331, 1
        %v333 = vmax.f32 %v331, %v332
        %vm334 = vcmp.ge.f32.partialorder %v327, %v333
        %v335 = vcvt.s32.f32 %v294
        %v336 = vsel %vm334, %v335, 8.0
        %v337 = vrot.slane %v336, 4
        %v338 = vmin.f32 %v336, %v337
        %v339 = vrot.slane %v338, 2
        %v340 = vmin.f32 %v338, %v339
        %v341 = vrot.slane %v340, 1
        %v342 = vmin.f32 %v340, %v341
        %v343 = vcvt.f32.s32.to.zero.pseudo %v342
        %344 = vst [vmem:[%s286] sm:$0x1] %v343
        %vm345 = vcmp.eq.s32.totalorder %v294, %v343
        %v346 = vld [vmem:[%s2] sm:$0xff]
        %348 = vset.pattern.permute.xlu0 0
        %349 = vperm.xlu0 %348, %v346
        %v350 = vpop.permute.xlu0 %349
        %v352 = vsel %vm345, %v350, 0.0
        %v353 = vrot.slane %v352, 4
        %v354 = vadd.f32 %v352, %v353
        %v355 = vrot.slane %v354, 2
        %v356 = vadd.f32 %v354, %v355
        %v357 = vrot.slane %v356, 1
        %v358 = vadd.f32 %v356, %v357
        %359 = vst [vmem:[%s292] sm:$0x1] %v358
        %s360 = sand.u32 %s110, 1
        %s361 = scalar_lea.sflag [#allocation4], %s360
        %s362 = sand.u32 %s110, 1
        %s363 = smul.addr %s362, 8
        %s364 = scalar_lea.vmem [#allocation7], %s363
        %s365 = sand.u32 %s29, 1
        %s366 = scalar_lea.sflag [#allocation9], %s365
        %s367 = sand.u32 %s136, 1
        %s368 = scalar_lea.vmem [#allocation8], %s367
        %s369 = sand.u32 %s29, 1
        %s370 = scalar_lea.sflag [#allocation9], %s369
        %s371 = sand.u32 %s162, 1
        %s372 = scalar_lea.vmem [#allocation10], %s371
        // Predicated region
        $region41: #{tpu_custom_call.1} parent=31 // pred_check
          %p373 = pneg %p120
        $region42: #{tpu_custom_call.1} parent=31 // pred_check_branch
          %375 = sbr.rel (%p373) target = $region44
        $region43: #{tpu_custom_call.1} parent=31 // pred_region
          %s377 = ssub.s32 128, 128
          %378 = vsyncadd %s361, %s377
          %s379 = smul.addr %s29, 128
          %s380 = scalar_lea.hbm %s3, %s379
          %s382 = sshll.u32 %s364, 4
          %s383 = int_to_ptr.vmem [resolvable:$true] %s382
          %385 = dma.vmem_to_hbm [thread:$0]  %s383, 128, %s380, %s361
        $region44: #{tpu_custom_call.1} parent=31 // pred_fallthru
          _
        // Predicated region
        $region45: #{tpu_custom_call.1} parent=31 // pred_check
          %p386 = pneg %p146
        $region46: #{tpu_custom_call.1} parent=31 // pred_check_branch
          %388 = sbr.rel (%p386) target = $region48
        $region47: #{tpu_custom_call.1} parent=31 // pred_region
          %s390 = ssub.s32 16, 16
          %391 = vsyncadd %s366, %s390
          %s392 = smul.addr %s29, 16
          %s393 = scalar_lea.hbm %s4, %s392
          %s395 = sshll.u32 %s368, 4
          %s396 = int_to_ptr.vmem [resolvable:$true] %s395
          %398 = dma.vmem_to_hbm [thread:$0]  %s396, 16, %s393, %s366
        $region48: #{tpu_custom_call.1} parent=31 // pred_fallthru
          _
        // Predicated region
        $region49: #{tpu_custom_call.1} parent=31 // pred_check
          %p399 = pneg %p172
        $region50: #{tpu_custom_call.1} parent=31 // pred_check_branch
          %401 = sbr.rel (%p399) target = $region52
        $region51: #{tpu_custom_call.1} parent=31 // pred_region
          %s403 = ssub.s32 16, 16
          %404 = vsyncadd %s370, %s403
          %s405 = smul.addr %s29, 16
          %s406 = scalar_lea.hbm %s5, %s405
          %s408 = sshll.u32 %s372, 4
          %s409 = int_to_ptr.vmem [resolvable:$true] %s408
          %411 = dma.vmem_to_hbm [thread:$0]  %s409, 16, %s406, %s370
        $region52: #{tpu_custom_call.1} parent=31 // pred_fallthru
          _
      $region32: #{tpu_custom_call.1} parent=5 // pred_fallthru
        _
      %p412 = scmp.le.s32.totalorder 2, %s24
      // Predicated region
      $region53: #{tpu_custom_call.1} parent=5 // pred_check
        %p413 = pneg %p412
      $region54: #{tpu_custom_call.1} parent=5 // pred_check_branch
        %415 = sbr.rel (%p413) target = $region56
      $region55: #{tpu_custom_call.1} parent=5 // pred_region
        %s416 = ssub.s32 %s24, 2
        // Predicated region
        $region57: #{tpu_custom_call.1} parent=55 // pred_check
          %p417 = pneg %p126
        $region58: #{tpu_custom_call.1} parent=55 // pred_check_branch
          %419 = sbr.rel (%p417) target = $region60
        $region59: #{tpu_custom_call.1} parent=55 // pred_region
          %s420 = sand.u32 %s111, 1
          %s421 = scalar_lea.sflag [#allocation4], %s420
          %s422 = sand.u32 %s111, 1
          %s423 = smul.addr %s422, 8
          %s424 = scalar_lea.vmem [#allocation7], %s423
          %425 = dma.done %s421, 128
        $region60: #{tpu_custom_call.1} parent=55 // pred_fallthru
          _
        // Predicated region
        $region61: #{tpu_custom_call.1} parent=55 // pred_check
          %p426 = pneg %p152
        $region62: #{tpu_custom_call.1} parent=55 // pred_check_branch
          %428 = sbr.rel (%p426) target = $region64
        $region63: #{tpu_custom_call.1} parent=55 // pred_region
          %s429 = sand.u32 %s30, 1
          %s430 = scalar_lea.sflag [#allocation9], %s429
          %s431 = sand.u32 %s137, 1
          %s432 = scalar_lea.vmem [#allocation8], %s431
          %433 = dma.done %s430, 16
        $region64: #{tpu_custom_call.1} parent=55 // pred_fallthru
          _
        // Predicated region
        $region65: #{tpu_custom_call.1} parent=55 // pred_check
          %p434 = pneg %p178
        $region66: #{tpu_custom_call.1} parent=55 // pred_check_branch
          %436 = sbr.rel (%p434) target = $region68
        $region67: #{tpu_custom_call.1} parent=55 // pred_region
          %s437 = sand.u32 %s30, 1
          %s438 = scalar_lea.sflag [#allocation9], %s437
          %s439 = sand.u32 %s163, 1
          %s440 = scalar_lea.vmem [#allocation10], %s439
          %441 = dma.done %s438, 16
        $region68: #{tpu_custom_call.1} parent=55 // pred_fallthru
          _
      $region56: #{tpu_custom_call.1} parent=5 // pred_fallthru
        _
    $region6: #{tpu_custom_call.1} parent=1 // loop_footer
      %s28 = sadd.s32 1, %s24
    $region7: #{tpu_custom_call.1} parent=1 // loop_footer_branch
      %23 = sbr.rel target = $region3
    $region8: #{tpu_custom_call.1} parent=1 // loop_exit
      _
    %442 = vsyncpa [#allocation3], 1
    %s443 = scalar_lea.sflag [#allocation3], 1
    %444 = vsyncpa %s443, 1
    %445 = vsyncpa [#allocation6], 1
    %s446 = scalar_lea.sflag [#allocation6], 1
    %447 = vsyncpa %s446, 1
    %448 = vsyncpa [#allocation4], 1
    %s449 = scalar_lea.sflag [#allocation4], 1
    %450 = vsyncpa %s449, 1
    %451 = vsyncpa [#allocation9], 1
    %s452 = scalar_lea.sflag [#allocation9], 1
    %453 = vsyncpa %s452, 1

</llo_original>
